<compile_context>
chip_gen: v7x
topology: tpu7x:2x2x1
jax: 0.10.0
libtpu: 0.0.40
codegen_flags: <defaults>
</compile_context>

<pallas_src>
import functools

import jax
import jax.numpy as jnp
from jax.experimental import pallas as pl
from jax.experimental.pallas import tpu as pltpu

_LANES = 128
_MAX_BLOCK_ROWS = 512  # 512 x 128 x 4B = 256 KiB per operand block


def _break_symmetry_kernel(bits_ref, pts_ref, out_ref, *, std_dev):
    """out = pts + std_dev * uniform[0,1)(bits)."""
    bits = bits_ref[...]  # uint32 random bits, same tile shape as pts
    # uint32 bits -> uniform f32 in [0, 1):
    # take 23 random mantissa bits, force exponent for [1, 2), subtract 1.
    mant = jax.lax.shift_right_logical(bits, jnp.uint32(9)) | jnp.uint32(0x3F800000)
    u01 = jax.lax.bitcast_convert_type(mant, jnp.float32) - jnp.float32(1.0)
    out_ref[...] = pts_ref[...] + jnp.float32(std_dev) * u01


def _round_up(x: int, m: int) -> int:
    return ((x + m - 1) // m) * m


@functools.partial(jax.jit, static_argnames=("std_dev",))
def break_symmetry(points: jax.Array, key: jax.Array, std_dev: float) -> jax.Array:
    """Applies BreakSymmetry to the coordinates only (features are untouched)."""
    orig_shape = points.shape
    orig_dtype = points.dtype
    total = points.size

    # Lane-dense layout: flatten (N, D) coords into a (rows, 128) f32 slab.
    rows = -(-total // _LANES)
    block_rows = min(_MAX_BLOCK_ROWS, max(8, _round_up(rows, 8)))
    rows_padded = _round_up(rows, block_rows)
    padded_total = rows_padded * _LANES

    flat = points.reshape(-1).astype(jnp.float32)
    flat = jnp.pad(flat, (0, padded_total - total))
    pts2d = flat.reshape(rows_padded, _LANES)

    # One random uint32 per element, drawn once in the wrapper (unique per tile).
    # TODO(synk): on real TPU hardware this could use on-chip pltpu.prng_* to
    # save the extra HBM read of the bits, but those primitives have no
    # CPU/interpret lowering.
    bits = jax.random.bits(key, (rows_padded, _LANES), dtype=jnp.uint32)

    grid = (rows_padded // block_rows,)
    kernel = functools.partial(_break_symmetry_kernel, std_dev=float(std_dev))

    out2d = pl.pallas_call(
        kernel,
        out_shape=jax.ShapeDtypeStruct((rows_padded, _LANES), jnp.float32),
        grid=grid,
        in_specs=[
            pl.BlockSpec((block_rows, _LANES), lambda i: (i, 0)),  # random bits
            pl.BlockSpec((block_rows, _LANES), lambda i: (i, 0)),  # coordinates
        ],
        out_specs=pl.BlockSpec((block_rows, _LANES), lambda i: (i, 0)),
        input_output_aliases={1: 0},  # overwrite the staged coordinate slab
        compiler_params=pltpu.CompilerParams(
            dimension_semantics=("parallel",),
        ),
    )(bits, pts2d)

    return out2d.reshape(-1)[:total].reshape(orig_shape).astype(orig_dtype)


if __name__ == "__main__":
    key = jax.random.PRNGKey(0)
    k_pts, k_feat, k_noise, k_noise2 = jax.random.split(key, 4)

    # Small point cloud: 128 points with xyz coords (+ features, untouched).
    N, D = 128, 3
    points = jax.random.normal(k_pts, (N, D), dtype=jnp.float32)
    features = jax.random.normal(k_feat, (N, 8), dtype=jnp.float32)

    std_dev = 0.05
    new_points = break_symmetry(points, k_noise, std_dev)
    new_points = jax.block_until_ready(new_points)

    # Shape / dtype preserved.
    assert new_points.shape == points.shape and new_points.dtype == points.dtype

    # Noise is uniform in [0, std_dev)  (torch.rand-based, non-negative).
    noise = new_points - points
    assert bool(jnp.all(noise >= 0.0)), "noise must be non-negative"
    assert bool(jnp.all(noise <= std_dev + 1e-5)), "noise must be < std_dev"
    assert float(jnp.max(noise)) > 0.0, "noise must be non-trivial"

    # Deterministic given the same key; different with a fresh key.
    again = jax.block_until_ready(break_symmetry(points, k_noise, std_dev))
    assert bool(jnp.all(again == new_points))
    other = jax.block_until_ready(break_symmetry(points, k_noise2, std_dev))
    assert not bool(jnp.all(other == new_points))

    # Features are not touched by this transform (passed through unchanged).
    _ = features

    print("KERNEL_OK")
</pallas_src>

<mosaic_0001>
module attributes {stable_mosaic.version = 11 : i64} {
  func.func @_break_symmetry_kernel(%arg0: i32, %arg1: memref<8x128xi32, #tpu.memory_space<vmem>>, %arg2: memref<8x128xf32, #tpu.memory_space<vmem>>, %arg3: memref<8x128xf32, #tpu.memory_space<vmem>>) attributes {dimension_semantics = [#tpu.dimension_semantics<parallel>], iteration_bounds = array<i64: 1>, scalar_prefetch = 0 : i64, scratch_operands = 0 : i64, tpu.core_type = #tpu.core_type<tc>, window_params = [{transform_indices = @transform_0, window_bounds = array<i64: 8, 128>}, {transform_indices = @transform_1, window_bounds = array<i64: 8, 128>}, {transform_indices = @transform_2, window_bounds = array<i64: 8, 128>}]} {
    %c0 = arith.constant 0 : index
    %c0_0 = arith.constant 0 : index
    %0 = vector.load %arg1[%c0, %c0_0] : memref<8x128xi32, #tpu.memory_space<vmem>>, vector<8x128xi32>
    %c9_i32 = arith.constant 9 : i32
    %1 = vector.broadcast %c9_i32 : i32 to vector<8x128xi32>
    %2 = arith.shrui %0, %1 : vector<8x128xi32>
    %c1065353216_i32 = arith.constant 1065353216 : i32
    %3 = vector.broadcast %c1065353216_i32 : i32 to vector<8x128xi32>
    %4 = arith.ori %2, %3 : vector<8x128xi32>
    %5 = tpu.bitcast %4 : vector<8x128xi32> -> vector<8x128xf32>
    %cst = arith.constant 1.000000e+00 : f32
    %6 = vector.broadcast %cst : f32 to vector<8x128xf32>
    %7 = arith.subf %5, %6 : vector<8x128xf32>
    %c0_1 = arith.constant 0 : index
    %c0_2 = arith.constant 0 : index
    %8 = vector.load %arg2[%c0_1, %c0_2] : memref<8x128xf32, #tpu.memory_space<vmem>>, vector<8x128xf32>
    %cst_3 = arith.constant 5.000000e-02 : f32
    %9 = vector.broadcast %cst_3 : f32 to vector<8x128xf32>
    %10 = arith.mulf %9, %7 : vector<8x128xf32>
    %11 = arith.addf %8, %10 : vector<8x128xf32>
    %c0_4 = arith.constant 0 : index
    %c0_5 = arith.constant 0 : index
    %12 = vector.load %arg3[%c0_4, %c0_5] : memref<8x128xf32, #tpu.memory_space<vmem>>, vector<8x128xf32>
    tpu.vector_store %arg3[%c0_4, %c0_5], %11 {strides = array<i32>} : memref<8x128xf32, #tpu.memory_space<vmem>>, vector<8x128xf32>,
    return
  }
  func.func @transform_0(%arg0: i32) -> (i32, i32) {
    %c0_i32 = arith.constant 0 : i32
    %c0_i32_0 = arith.constant 0 : i32
    return %arg0, %c0_i32 : i32, i32
  }
  func.func @transform_1(%arg0: i32) -> (i32, i32) {
    %c0_i32 = arith.constant 0 : i32
    %c0_i32_0 = arith.constant 0 : i32
    return %arg0, %c0_i32 : i32, i32
  }
  func.func @transform_2(%arg0: i32) -> (i32, i32) {
    %c0_i32 = arith.constant 0 : i32
    %c0_i32_0 = arith.constant 0 : i32
    return %arg0, %c0_i32 : i32, i32
  }
}

</mosaic_0001>

<llo_original>
// kernel: break_symmetry.1
$region0: #{break_symmetry.1}
  #allocation0 [shape = 'u32[]', space=smem, size = 0x4, offset = 0x4, fixed_abs, tag = 'smem constant byte address 0x4 - core index']
  #allocation1 [shape = 'u32[144,128]{1,0:T(1,128)}', space=vmem, size = 0x12000, scoped, tag = 'internal scratch']
  %s0 = inlined_call_operand.vmem [shape: u32[8,128], index: 0, kind: input, shape index: {}]
  %s1 = inlined_call_operand.vmem [shape: f32[8,128], index: 1, kind: input, shape index: {}, may-alias: {1,2}]
  %s2 = inlined_call_operand.vmem [shape: f32[8,128], index: 2, kind: output, shape index: {}, may-alias: {1,2}]
  %s3 = sld [smem:[#allocation0]]
  $region18: #{break_symmetry.1} parent=0
    _
  %s5 = ssub.s32 1, %s3
  %s6 = scalar_select 0, %s5, %s3
  // Predicated region
  $region2: #{break_symmetry.1} parent=0 // pred_check
    _
  $region3: #{break_symmetry.1} parent=0 // pred_check_branch
    %8 = sbr.rel (0) target = $region5
  $region4: #{break_symmetry.1} parent=0 // pred_region
    _
  $region5: #{break_symmetry.1} parent=0 // pred_fallthru
    _
  // Predicated region
  $region6: #{break_symmetry.1} parent=0 // pred_check
    _
  $region7: #{break_symmetry.1} parent=0 // pred_check_branch
    %10 = sbr.rel (0) target = $region9
  $region8: #{break_symmetry.1} parent=0 // pred_region
    _
  $region9: #{break_symmetry.1} parent=0 // pred_fallthru
    _
  %v11 = vld [vmem:[%s0] sm:$0xff]
  %v12 = vshrl.u32 %v11, 9
  %v13 = vor.u32 %v12, 1065353216
  %v15 = vsub.f32 %v13, 1.0
  %v16 = vld [vmem:[%s1] sm:$0xff]
  %v17 = vmul.f32 %v15, 0.05
  %v18 = vadd.f32 %v16, %v17
  %19 = vst [vmem:[%s2] sm:$0xff] %v18
  // Predicated region
  $region10: #{break_symmetry.1} parent=0 // pred_check
    _
  $region11: #{break_symmetry.1} parent=0 // pred_check_branch
    %21 = sbr.rel (0) target = $region13
  $region12: #{break_symmetry.1} parent=0 // pred_region
    _
  $region13: #{break_symmetry.1} parent=0 // pred_fallthru
    _
  // Predicated region
  $region14: #{break_symmetry.1} parent=0 // pred_check
    _
  $region15: #{break_symmetry.1} parent=0 // pred_check_branch
    %23 = sbr.rel (0) target = $region17
  $region16: #{break_symmetry.1} parent=0 // pred_region
    _
  $region17: #{break_symmetry.1} parent=0 // pred_fallthru
    _

</llo_original>
